<compile_context>
chip_gen: v5e
topology: v5e:2x2
jax: 0.10.0
libtpu: 0.0.40
codegen_flags: <defaults>
</compile_context>

<pallas_src>
import jax
import jax.numpy as jnp
from jax.experimental import pallas as pl
from jax.experimental.pallas import tpu as pltpu


def _round_up(x: int, m: int) -> int:
    return ((x + m - 1) // m) * m


def _vmem_capacity_bytes() -> int:
    try:
        return int(pltpu.get_tpu_info().vmem_capacity_bytes)
    except Exception:
        return 64 << 20  # conservative (v7x-sized); v5e/v6e have 128 MiB


def _inner_product_kernel(x_ref, w_ref, o_ref):
    # x_ref: (tile_b, n) native dtype (streamed); w_ref: (1, n) f32 (VMEM-resident);
    # o_ref: (1, tile_b) f32 lane-dense output row.
    prod = x_ref[...].astype(jnp.float32) * w_ref[...]     # VPU broadcast-multiply
    row = jnp.sum(prod, axis=-1)                            # (tile_b,) XLU lane reduce
    o_ref[...] = row[None, :].astype(o_ref.dtype)           # relayout to lane-major row


def inner_product_forward(
    x: jax.Array,
    w: jax.Array,
    *,
    max_tile_rows: int | None = None,
    target_tile_bytes: int = 4 << 20,
) -> jax.Array:
    """Forward pass of InnerProductModel: returns x @ w for x (B, n), w (n,) -> (B,)."""
    B, n = x.shape
    itemsize = jnp.dtype(x.dtype).itemsize
    # Sublane packing granularity for the streamed x tiles (8 f32 / 16 bf16 / 32 int8).
    sublane = max(8, 32 // itemsize)
    row_bytes = n * itemsize

    w2d = w.reshape(1, n).astype(jnp.float32)  # lane-major weight row, VMEM-resident

    vmem_cap = _vmem_capacity_bytes()
    # Double-buffered x-tile budget: ~half of VMEM (~32 MiB on v7x, ~64 MiB on v5e/v6e).
    x_buffer_budget = vmem_cap // 2

    b_ceil = _round_up(B, sublane)

    # --- Tile rows chosen by BYTES (HBM-bound: bigger tiles amortize the ~0.35us/step
    # grid overhead), clamped by the double-buffer budget. ---
    tile_b = max(sublane, target_tile_bytes // max(row_bytes, 1))
    tile_b = min(tile_b, max(sublane, x_buffer_budget // (2 * max(row_bytes, 1))))
    if max_tile_rows is not None:
        tile_b = min(tile_b, max(sublane, max_tile_rows))

    if tile_b >= b_ceil:
        # Whole batch fits in one tile. On v7x (2 TCs) split into >=2 blocks when the
        # batch is large enough that the split is free (harmless on 1-TC chips).
        if b_ceil >= 2 * 128 and b_ceil * row_bytes >= (4 << 20):
            tile_b = _round_up(pl.cdiv(b_ceil, 2), 128)
        else:
            tile_b = b_ceil
    else:
        # Multi-block: keep tile_b a multiple of 128 so the (1, tile_b) output blocks
        # are full, unmasked lane-dense stores (and sublane-aligned for any dtype).
        tile_b = max(128, (tile_b // 128) * 128)
    # TODO(synk): for very large n (a single 128-row tile no longer fits the VMEM budget),
    # add a second "arbitrary" grid axis over K-chunks of n with a VMEM accumulator.
    # TODO(synk): for tiny n (<128) a lane-packing reshape (128//n rows per vreg row) or a
    # plain XLA dot would recover lane utilization; kept on the Pallas path here so the
    # kernel itself is exercised.

    grid_b = pl.cdiv(B, tile_b)
    out_cols = grid_b * tile_b  # lane-dense padded output width; sliced to B below

    # --- VMEM limit: double-buffered x tiles + resident weight row + output rows,
    # clamped per-chip (v7x only has 64 MiB physical VMEM). ---
    x_bytes = 2 * tile_b * row_bytes
    w_bytes = 2 * n * 4
    o_bytes = 2 * tile_b * 4
    vmem_limit = int(1.25 * (x_bytes + w_bytes + o_bytes)) + (4 << 20)
    vmem_limit = max(16 << 20, min(vmem_limit, int(0.75 * vmem_cap)))

    cost = pl.CostEstimate(
        flops=2 * B * n,
        transcendentals=0,
        bytes_accessed=B * row_bytes + n * 4 + B * 4,
    )

    out = pl.pallas_call(
        _inner_product_kernel,
        out_shape=jax.ShapeDtypeStruct((1, out_cols), jnp.float32),
        grid=(grid_b,),
        in_specs=[
            # Streamed, double-buffered batch tiles of x in its NATIVE dtype. The ragged
            # trailing tile reads unspecified rows past B; they are strictly per-row and
            # the matching output lanes are sliced off below (no wrapper-side padding).
            pl.BlockSpec((tile_b, n), lambda i: (i, 0)),
            # Constant block index -> weight row stays VMEM-resident (no re-DMA per step).
            pl.BlockSpec((1, n), lambda i: (0, 0)),
        ],
        # Lane-dense output: each step writes a full (1, tile_b) row -> unmasked vst.
        out_specs=pl.BlockSpec((1, tile_b), lambda i: (0, i)),
        compiler_params=pltpu.CompilerParams(
            dimension_semantics=("parallel",),
            vmem_limit_bytes=vmem_limit,
        ),
        cost_estimate=cost,
    )(x, w2d)

    return out[0, :B]  # (B,) — matches PyTorch F.linear with a 1-D weight


if __name__ == "__main__":
    key = jax.random.PRNGKey(0)

    def ref(x, w):
        return jnp.sum(x.astype(jnp.float32) * w[None, :].astype(jnp.float32), axis=-1)

    k1, k2, k3, key = jax.random.split(key, 4)

    # Case 1: the module's tiny shape (n=32); weight = arange(n) per __init__.
    n1, b1 = 32, 8
    w1 = jnp.arange(n1, dtype=jnp.float32)
    x1 = jax.random.normal(k1, (b1, n1), dtype=jnp.float32)
    y1 = inner_product_forward(x1, w1)
    jax.block_until_ready(y1)
    assert y1.shape == (b1,)
    assert jnp.allclose(y1, ref(x1, w1), atol=1e-4, rtol=1e-5)

    # Case 2: multi-block grid with a ragged trailing tile (pipelined path, no padding).
    n2, b2 = 256, 300
    w2 = jnp.arange(n2, dtype=jnp.float32)
    x2 = jax.random.normal(k2, (b2, n2), dtype=jnp.float32)
    y2 = inner_product_forward(x2, w2, max_tile_rows=128)
    jax.block_until_ready(y2)
    assert y2.shape == (b2,)
    assert jnp.allclose(y2, ref(x2, w2), atol=1e-3, rtol=1e-5)

    # Case 3: bf16 activations stay bf16 in HBM; cast on the VPU inside the kernel.
    n3, b3 = 128, 64
    w3 = jnp.arange(n3, dtype=jnp.float32)
    x3 = jax.random.normal(k3, (b3, n3), dtype=jnp.float32).astype(jnp.bfloat16)
    y3 = inner_product_forward(x3, w3)
    jax.block_until_ready(y3)
    assert y3.shape == (b3,)
    assert jnp.allclose(y3, ref(x3, w3), atol=1e-2, rtol=1e-4)

    print("KERNEL_OK")
</pallas_src>

<mosaic_0001>
module attributes {stable_mosaic.version = 11 : i64} {
  func.func @_inner_product_kernel(%arg0: i32, %arg1: memref<8x32xf32, #tpu.memory_space<vmem>>, %arg2: memref<1x32xf32, #tpu.memory_space<vmem>>, %arg3: memref<1x8xf32, #tpu.memory_space<vmem>>) attributes {dimension_semantics = [#tpu.dimension_semantics<parallel>], iteration_bounds = array<i64: 1>, scalar_prefetch = 0 : i64, scratch_operands = 0 : i64, tpu.core_type = #tpu.core_type<tc>, window_params = [{transform_indices = @transform_0, window_bounds = array<i64: 8, 32>}, {pipeline_mode = #tpu.pipeline_mode<synchronous>, transform_indices = @transform_1, window_bounds = array<i64: 1, 32>}, {transform_indices = @transform_2, window_bounds = array<i64: 1, 8>}]} {
    %c0 = arith.constant 0 : index
    %c0_0 = arith.constant 0 : index
    %0 = vector.load %arg1[%c0, %c0_0] : memref<8x32xf32, #tpu.memory_space<vmem>>, vector<8x32xf32>
    %c0_1 = arith.constant 0 : index
    %c0_2 = arith.constant 0 : index
    %1 = vector.load %arg2[%c0_1, %c0_2] : memref<1x32xf32, #tpu.memory_space<vmem>>, vector<1x32xf32>
    %2 = vector.broadcast %1 : vector<1x32xf32> to vector<8x32xf32>
    %3 = arith.mulf %0, %2 : vector<8x32xf32>
    %cst = arith.constant dense<0.000000e+00> : vector<8xf32>
    %4 = vector.multi_reduction <add>, %3, %cst [1] : vector<8x32xf32> to vector<8xf32>
    %5 = vector.shape_cast %4 : vector<8xf32> to vector<1x8xf32>
    %c0_3 = arith.constant 0 : index
    %c0_4 = arith.constant 0 : index
    %6 = vector.load %arg3[%c0_3, %c0_4] : memref<1x8xf32, #tpu.memory_space<vmem>>, vector<1x8xf32>
    tpu.vector_store %arg3[%c0_3, %c0_4], %5 {strides = array<i32>} : memref<1x8xf32, #tpu.memory_space<vmem>>, vector<1x8xf32>,
    return
  }
  func.func @transform_0(%arg0: i32) -> (i32, i32) {
    %c0_i32 = arith.constant 0 : i32
    %c0_i32_0 = arith.constant 0 : i32
    return %arg0, %c0_i32 : i32, i32
  }
  func.func @transform_1(%arg0: i32) -> (i32, i32) {
    %c0_i32 = arith.constant 0 : i32
    %c0_i32_0 = arith.constant 0 : i32
    %c0_i32_1 = arith.constant 0 : i32
    return %c0_i32, %c0_i32_0 : i32, i32
  }
  func.func @transform_2(%arg0: i32) -> (i32, i32) {
    %c0_i32 = arith.constant 0 : i32
    %c0_i32_0 = arith.constant 0 : i32
    return %c0_i32, %arg0 : i32, i32
  }
}

</mosaic_0001>

<llo_original>
// kernel: tpu_custom_call.1
$region0: #{tpu_custom_call.1}
  #allocation0 [shape = 'u32[]', space=smem, size = 0x4, offset = 0x4, fixed_abs, tag = 'smem constant byte address 0x4 - core index']
  #allocation1 [shape = 'u32[72,128]{1,0:T(1,128)}', space=vmem, size = 0x9000, scoped, tag = 'internal scratch']
  %s0 = inlined_call_operand.hbm [shape: f32[8,32], index: 0, kind: input, shape index: {}]
  %s1 = inlined_call_operand.hbm [shape: f32[1,32], index: 1, kind: input, shape index: {}]
  %s2 = inlined_call_operand.hbm [shape: f32[1,8], index: 2, kind: output, shape index: {}]
  %s3 = sld [smem:[#allocation0]]
  $region26: #{tpu_custom_call.1} parent=0
    _
  %s5 = ssub.s32 1, %s3
  %s6 = scalar_select 0, %s5, %s3
  $region1: #{tpu_custom_call.1} parent=0
    #allocation2 [shape = 'u8[4096]{0}', space=vmem, size = 0x1000, scoped, tag = 'input window, operand 0, single buffered']
    #allocation3 [shape = 's32[1]{0}', space=sflag, size = 0x4, scoped, tag = 'scoped memory for tpu_custom_call.1']
    #allocation4 [shape = 's32[1]{0}', space=sflag, size = 0x4, scoped, tag = 'scoped memory for tpu_custom_call.1']
    #allocation5 [shape = 'u8[512]{0}', space=vmem, size = 0x400, scoped, tag = 'input window, operand 1, single buffered']
    #allocation6 [shape = 's32[1]{0}', space=sflag, size = 0x4, scoped, tag = 'scoped memory for tpu_custom_call.1']
    #allocation7 [shape = 'u8[512]{0}', space=vmem, size = 0x400, scoped, tag = 'output window, operand 0, single buffered']
    %7 = vsyncpa [#allocation3], 0
    %8 = vsyncpa [#allocation6], 0
    %9 = vsyncpa [#allocation4], 0
    // Predicated region
    $region2: #{tpu_custom_call.1} parent=1 // pred_check
      _
    $region3: #{tpu_custom_call.1} parent=1 // pred_check_branch
      %11 = sbr.rel (0) target = $region5
    $region4: #{tpu_custom_call.1} parent=1 // pred_region
      %13 = vsyncadd [#allocation3], 0
      %s15 = sshll.u32 %s0, 4
      %s16 = int_to_ptr.hbm [resolvable:$true] %s15
      %s17 = sshll.u32 [#allocation2], 4
      %s18 = int_to_ptr.vmem [resolvable:$true] %s17
      %20 = dma.hbm_to_vmem [thread:$0]  %s16, 128, %s18, [#allocation3]
    $region5: #{tpu_custom_call.1} parent=1 // pred_fallthru
      _
    // Predicated region
    $region6: #{tpu_custom_call.1} parent=1 // pred_check
      _
    $region7: #{tpu_custom_call.1} parent=1 // pred_check_branch
      %22 = sbr.rel (0) target = $region9
    $region8: #{tpu_custom_call.1} parent=1 // pred_region
      %24 = vsyncadd [#allocation6], 0
      %s26 = sshll.u32 %s1, 4
      %s27 = int_to_ptr.hbm [resolvable:$true] %s26
      %s28 = sshll.u32 [#allocation5], 4
      %s29 = int_to_ptr.vmem [resolvable:$true] %s28
      %31 = dma.hbm_to_vmem [thread:$0]  %s27, 16, %s29, [#allocation6]
    $region9: #{tpu_custom_call.1} parent=1 // pred_fallthru
      _
    // Predicated region
    $region10: #{tpu_custom_call.1} parent=1 // pred_check
      _
    $region11: #{tpu_custom_call.1} parent=1 // pred_check_branch
      %33 = sbr.rel (0) target = $region13
    $region12: #{tpu_custom_call.1} parent=1 // pred_region
      %35 = dma.done [#allocation3], 128
    $region13: #{tpu_custom_call.1} parent=1 // pred_fallthru
      _
    // Predicated region
    $region14: #{tpu_custom_call.1} parent=1 // pred_check
      _
    $region15: #{tpu_custom_call.1} parent=1 // pred_check_branch
      %37 = sbr.rel (0) target = $region17
    $region16: #{tpu_custom_call.1} parent=1 // pred_region
      %39 = dma.done [#allocation6], 16
    $region17: #{tpu_custom_call.1} parent=1 // pred_fallthru
      _
    %v40 = vld [vmem:[#allocation2] sm:$0xff]
    %v41 = vld [vmem:[#allocation5] sm:$0x1]
    %v43 = vperm.slane %v41, 0
    %v45 = vmul.f32 %v40, %v43
    %vm46 = vcmask 261120
    %v47 = vsel %vm46, %v45, 0.0
    %48 = vadd.xlane.f32.xlu0 %v47
    %v49 = vpop.xlane.xlu0 %48
    %v51 = vlaneseq
    %v52 = vand.u32 %v51, 127
    %v53 = vperm.slane %v49, %v52
    %vm55 = vcmask 57344
    %56 = vst.msk [vmem:[#allocation7] sm:$0x1] %vm55, %v53
    // Predicated region
    $region18: #{tpu_custom_call.1} parent=1 // pred_check
      _
    $region19: #{tpu_custom_call.1} parent=1 // pred_check_branch
      %58 = sbr.rel (0) target = $region21
    $region20: #{tpu_custom_call.1} parent=1 // pred_region
      %60 = vsyncadd [#allocation4], 0
      %s62 = sshll.u32 [#allocation7], 4
      %s63 = int_to_ptr.vmem [resolvable:$true] %s62
      %s64 = sshll.u32 %s2, 4
      %s65 = int_to_ptr.hbm [resolvable:$true] %s64
      %67 = dma.vmem_to_hbm [thread:$0]  %s63, 16, %s65, [#allocation4]
    $region21: #{tpu_custom_call.1} parent=1 // pred_fallthru
      _
    // Predicated region
    $region22: #{tpu_custom_call.1} parent=1 // pred_check
      _
    $region23: #{tpu_custom_call.1} parent=1 // pred_check_branch
      %69 = sbr.rel (0) target = $region25
    $region24: #{tpu_custom_call.1} parent=1 // pred_region
      %71 = dma.done [#allocation4], 16
    $region25: #{tpu_custom_call.1} parent=1 // pred_fallthru
      _
    %72 = vsyncpa [#allocation3], 1
    %73 = vsyncpa [#allocation6], 1
    %74 = vsyncpa [#allocation4], 1

</llo_original>
